<compile_context>
chip_gen: v7x
topology: tpu7x:2x2x1
jax: 0.10.0
libtpu: 0.0.40
codegen_flags: <defaults>
</compile_context>

<pallas_src>
import functools

import jax
import jax.numpy as jnp
from jax import lax
from jax.experimental import pallas as pl
from jax.experimental.pallas import tpu as pltpu

_LANE = 128
_EPS = 1e-5


def _round_up(x, m):
    return ((x + m - 1) // m) * m


def _recip(x):
    """EUP-cheap reciprocal: approx vrcp + one Newton step (~f32 accurate)."""
    r = pl.reciprocal(x, approx=True)
    return r * (2.0 - x * r)


# --------------------------------------------------------------------------- #
# Kernel
# --------------------------------------------------------------------------- #
def _crs_kernel(pp_ref, p_ref, dpdt_ref, dt_ref, rt_ref, nt_ref,
                u_c, lu_c, n_c, *, tssr, tnsr, sigma, biot, n_chunks):
    k = pl.program_id(1)          # step-tile index (sequential / "arbitrary")
    rows = p_ref.shape[0]

    # Per-row constants (lane 0..5 of the small pp block).
    mu = pp_ref[:, 0:1]           # mu_minus_alpha
    rc = pp_ref[:, 1:2]           # rate_coeff
    inv_rf = pp_ref[:, 2:3]       # 1 / rate_factor  (= eta)
    rf = pp_ref[:, 3:4]           # rate_factor

    # Seed the carried state at the first step tile of each row tile.
    @pl.when(k == 0)
    def _():
        u0 = _recip(pp_ref[:, 4:5])          # u = 1 / R0
        u_c[...] = u0
        lu_c[...] = jnp.log(u0)
        n_c[...] = pp_ref[:, 5:6]            # N0

    lane = lax.broadcasted_iota(jnp.int32, (rows, _LANE), 1)
    shifts = (1, 2, 4, 8, 16, 32, 64)
    masks = [lane >= d for d in shifts]      # hoisted out of the chunk loop

    def shifted(x, i, fill):
        # y[:, j] = x[:, j - shifts[i]] for j >= shifts[i], else `fill`
        return jnp.where(masks[i], pltpu.roll(x, shift=shifts[i], axis=1), fill)

    for c in range(n_chunks):                # static unroll (1-4 chunks)
        sl = slice(c * _LANE, (c + 1) * _LANE)
        p = p_ref[:, sl]
        dpdt = dpdt_ref[:, sl]
        dt = dt_ref[:, sl]

        # Dense, fully parallel per-element precompute (natural layout).
        s_dot = tssr - mu * (tnsr - dpdt)
        asigma = rc * (sigma - biot * p)
        z = s_dot * dt * _recip(asigma)                  # log(exp_term)
        en = jnp.exp(-z)                                 # 1 / exp_term
        a = (1.0 + _EPS) * en                            # u_i = a*u_{i-1} + b
        b = (inv_rf * _recip(s_dot)) * (1.0 - en)
        c2 = asigma * rf                                 # asigma / eta

        # Inclusive affine prefix scan along the 128 steps of this lane chunk:
        # (a_i, b_i) <- compose of steps [chunk_start .. i].
        for i in range(len(shifts)):
            a_sh = shifted(a, i, 1.0)
            b_sh = shifted(b, i, 0.0)
            b = a * b_sh + b
            a = a * a_sh

        u_in = u_c[...]
        lu_in = lu_c[...]
        n_in = n_c[...]

        u = a * u_in + b                                 # u_i = 1 / R_i
        lu = jnp.log(u)
        lu_prev = jnp.where(masks[0], pltpu.roll(lu, shift=1, axis=1), lu_in)
        n_step = c2 * (z + lu - lu_prev)                 # c2 * log(denom_i)

        # Inclusive cumsum of N along the lane axis.
        cs = n_step
        for i in range(len(shifts)):
            cs = cs + shifted(cs, i, 0.0)
        ncum = n_in + cs

        rt_ref[:, sl] = _recip(u)
        nt_ref[:, sl] = ncum

        # Carries for the next chunk / step tile.
        u_c[...] = u[:, _LANE - 1:_LANE]
        lu_c[...] = lu[:, _LANE - 1:_LANE]
        n_c[...] = ncum[:, _LANE - 1:_LANE]


# --------------------------------------------------------------------------- #
# Wrapper
# --------------------------------------------------------------------------- #
def _vmem_capacity_bytes():
    try:
        info = pltpu.get_tpu_info()
        for attr in ("vmem_capacity_bytes", "vmem_size_bytes", "vmem_bytes"):
            v = getattr(info, attr, None)
            if v:
                return int(v)
    except Exception:
        pass
    return 64 * 1024 * 1024      # conservative fallback (smallest current VMEM)


def _num_tensorcores():
    n = None
    try:
        info = pltpu.get_tpu_info()
        n = getattr(info, "num_cores", None) or getattr(info, "cores_per_chip", None)
    except Exception:
        n = None
    if not n:
        try:
            n = getattr(jax.devices()[0], "num_cores", None)
        except Exception:
            n = None
    try:
        return max(1, int(n)) if n else 1
    except Exception:
        return 1


def _bytes_per_row(n_chunks):
    # Double-buffered data blocks (3 in + 2 out), lane-padded pp block, carries,
    # and a conservative allowance for compiler-materialized chunk temporaries.
    return 4 * _LANE * (2 * 5 * n_chunks + 2 + 3 + 14 * n_chunks)


def _pick_tiling(M, nsteps, budget, num_tc, m_tile_req, step_tile_req):
    n_chunks_total = max(1, -(-nsteps // _LANE))
    usable = max(budget - (2 << 20), 8 * _bytes_per_row(1))

    if m_tile_req is not None:
        m_tile = int(m_tile_req)
    else:
        max_rows = max(8, usable // _bytes_per_row(1))
        m_tile = M if M <= max_rows else max_rows

    if m_tile >= M:
        m_tile, m_tiles = M, 1
    else:
        m_tile = max(8, (m_tile // 8) * 8)
        m_tiles = -(-M // m_tile)

    # Megacore split only on >=2-TC chips and only when each half stays wide.
    if (m_tile_req is None and num_tc >= 2 and m_tiles == 1
            and m_tile >= 2048 and m_tile % 16 == 0):
        m_tile //= 2
        m_tiles = 2

    if step_tile_req is not None:
        n_chunks = max(1, int(step_tile_req) // _LANE)
    else:
        n_chunks = 1
        for cand in (2, 4):          # step down in 128-step increments
            if cand <= n_chunks_total and m_tile * _bytes_per_row(cand) <= usable:
                n_chunks = cand
    n_chunks = min(n_chunks, n_chunks_total)
    return m_tile, m_tiles, n_chunks


def batch_crs_forward(params, p, dpdt, delta_t, R0, N0, site_info, *,
                      m_tile=None, step_tile=None):
    """JAX/Pallas equivalent of BatchCRSModel.forward.

    params: [nsites, 3]  (mu_minus_alpha, rate_coeff, rate_factor)
    p, dpdt, delta_t: [nsites, nbatch, nsteps]
    R0, N0: [nsites, nbatch]
    returns (Rt, Nt), each [nsites, nbatch, nsteps]
    """
    nsites, nbatch, nsteps = p.shape
    M = nsites * nbatch

    tssr = float(site_info['tectonic_shear_stressing_rate'])
    tnsr = float(site_info['tectonic_normal_stressing_rate'])
    sigma = float(site_info['sigma'])
    biot = float(site_info['biot'])

    phys = _vmem_capacity_bytes()
    vmem_limit = max(32 << 20, min(phys * 3 // 4, 110 << 20))
    num_tc = _num_tensorcores()
    mt, m_tiles, n_chunks = _pick_tiling(M, nsteps, vmem_limit, num_tc,
                                         m_tile, step_tile)

    T = n_chunks * _LANE
    M_pad = m_tiles * mt
    S_pad = _round_up(nsteps, T)
    n_step_tiles = S_pad // T

    # Per-row (site, batch) constant plane: [mu, rc, 1/rf, rf, R0, N0, 0, 0].
    params = params.astype(jnp.float32)

    def per_row(v):
        return jnp.broadcast_to(v[:, None], (nsites, nbatch)).reshape(M)

    cols = [per_row(params[:, 0]), per_row(params[:, 1]),
            per_row(1.0 / params[:, 2]), per_row(params[:, 2]),
            R0.reshape(M).astype(jnp.float32), N0.reshape(M).astype(jnp.float32),
            jnp.zeros((M,), jnp.float32), jnp.zeros((M,), jnp.float32)]
    pad_vals = (0.0, 1.0, 1.0, 1.0, 1.0, 0.0, 0.0, 0.0)
    if M_pad > M:
        cols = [jnp.pad(c, (0, M_pad - M), constant_values=v)
                for c, v in zip(cols, pad_vals)]
    pp = jnp.stack(cols, axis=1)                               # (M_pad, 8)

    def prep(x):
        x = x.reshape(M, nsteps).astype(jnp.float32)           # free view
        if M_pad > M or S_pad > nsteps:
            x = jnp.pad(x, ((0, M_pad - M), (0, S_pad - nsteps)))
        return x

    p2, dpdt2, dt2 = prep(p), prep(dpdt), prep(delta_t)

    kernel = functools.partial(_crs_kernel, tssr=tssr, tnsr=tnsr,
                               sigma=sigma, biot=biot, n_chunks=n_chunks)

    data_spec = pl.BlockSpec((mt, T), lambda r, k: (r, k))
    pp_spec = pl.BlockSpec((mt, 8), lambda r, k: (r, 0))

    rt, nt = pl.pallas_call(
        kernel,
        out_shape=(
            jax.ShapeDtypeStruct((M_pad, S_pad), jnp.float32),
            jax.ShapeDtypeStruct((M_pad, S_pad), jnp.float32),
        ),
        grid_spec=pltpu.PrefetchScalarGridSpec(
            num_scalar_prefetch=0,
            grid=(m_tiles, n_step_tiles),
            in_specs=[pp_spec, data_spec, data_spec, data_spec],
            out_specs=[data_spec, data_spec],
            scratch_shapes=[
                pltpu.VMEM((mt, 1), jnp.float32),   # u  = 1/R carry
                pltpu.VMEM((mt, 1), jnp.float32),   # log(u) carry
                pltpu.VMEM((mt, 1), jnp.float32),   # cumsum(N) carry
            ],
        ),
        compiler_params=pltpu.CompilerParams(
            dimension_semantics=("parallel", "arbitrary"),
            vmem_limit_bytes=int(vmem_limit),
        ),
    )(pp, p2, dpdt2, dt2)

    def back(x):
        if M_pad > M or S_pad > nsteps:
            x = x[:M, :nsteps]
        return x.reshape(nsites, nbatch, nsteps)

    return back(rt), back(nt)


# --------------------------------------------------------------------------- #
# Pure-JAX reference (mirrors the PyTorch forward) and test harness
# --------------------------------------------------------------------------- #
def _reference_forward(params, p, dpdt, delta_t, R0, N0, site_info):
    tssr = site_info['tectonic_shear_stressing_rate']
    tnsr = site_info['tectonic_normal_stressing_rate']
    sigma = site_info['sigma']
    biot = site_info['biot']

    mu = params[:, 0][:, None, None]
    rc = params[:, 1][:, None, None]
    rf = params[:, 2][:, None, None]
    eta2 = (1.0 / rf)[:, :, 0]                     # (nsites, 1)

    s_dot = tssr - mu * (tnsr - dpdt)              # (nsites, nbatch, nsteps)
    asigma = rc * (sigma - biot * p)
    exp_term = jnp.exp(s_dot * delta_t / asigma)

    def step(R, xs):
        s, e, a = xs
        scaled = eta2 * R / s
        denom = 1.0 - scaled * (1.0 - e) + 1e-5
        Rn = R * e / denom
        N = a / eta2 * jnp.log(denom)
        return Rn, (Rn, N)

    xs = (jnp.moveaxis(s_dot, -1, 0),
          jnp.moveaxis(exp_term, -1, 0),
          jnp.moveaxis(asigma, -1, 0))
    _, (Rt, Nt) = lax.scan(step, R0, xs)
    Rt = jnp.moveaxis(Rt, 0, -1)
    Nt = jnp.moveaxis(Nt, 0, -1)
    Nt = jnp.cumsum(Nt, axis=-1) + N0[:, :, None]
    return Rt, Nt


def _make_inputs(key, nsites, nbatch, nsteps):
    k0, k1, k2, k3, k4, k5, k6, k7 = jax.random.split(key, 8)
    mu_minus_alpha = jax.random.uniform(k0, (nsites,), minval=0.3, maxval=0.7)
    rate_coeff = jax.random.uniform(k1, (nsites,), minval=0.005, maxval=0.02)
    rate_factor = jax.random.uniform(k2, (nsites,), minval=5e-4, maxval=2e-3)
    params = jnp.stack([mu_minus_alpha, rate_coeff, rate_factor], axis=-1)
    p = jax.random.uniform(k3, (nsites, nbatch, nsteps), minval=0.0, maxval=0.1)
    dpdt = jax.random.uniform(k4, (nsites, nbatch, nsteps), minval=1e-4, maxval=1e-3)
    delta_t = jax.random.uniform(k5, (nsites, nbatch, nsteps), minval=0.05, maxval=0.2)
    R0 = jax.random.uniform(k6, (nsites, nbatch), minval=1e-7, maxval=1e-5)
    N0 = jax.random.uniform(k7, (nsites, nbatch), minval=0.0, maxval=1e-3)
    return params, p, dpdt, delta_t, R0, N0


if __name__ == "__main__":
    site_info = {
        'tectonic_shear_stressing_rate': 1e-3,
        'tectonic_normal_stressing_rate': 1e-4,
        'sigma': 10.0,
        'biot': 0.6,
    }

    key = jax.random.PRNGKey(0)
    key_a, key_b = jax.random.split(key)

    # Test 1: small shapes — single row tile, single step tile, padded tail steps.
    args = _make_inputs(key_a, nsites=4, nbatch=8, nsteps=16)
    Rt, Nt = batch_crs_forward(*args, site_info)
    jax.block_until_ready((Rt, Nt))
    Rt_ref, Nt_ref = _reference_forward(*args, site_info)
    assert jnp.allclose(Rt, Rt_ref, rtol=1e-4, atol=1e-6), "Rt mismatch (small)"
    assert jnp.allclose(Nt, Nt_ref, rtol=1e-4, atol=1e-6), "Nt mismatch (small)"

    # Test 2: row tiling + multiple step tiles (carry propagation) + padded tail.
    args = _make_inputs(key_b, nsites=16, nbatch=96, nsteps=320)
    Rt_ref, Nt_ref = _reference_forward(*args, site_info)
    Rt, Nt = batch_crs_forward(*args, site_info, m_tile=768, step_tile=128)
    jax.block_until_ready((Rt, Nt))
    assert jnp.allclose(Rt, Rt_ref, rtol=1e-4, atol=1e-6), "Rt mismatch (tiled)"
    assert jnp.allclose(Nt, Nt_ref, rtol=1e-4, atol=1e-6), "Nt mismatch (tiled)"

    # Test 3: multi-chunk step blocks (in-kernel 128-step chunk loop), auto rows.
    Rt, Nt = batch_crs_forward(*args, site_info, step_tile=256)
    jax.block_until_ready((Rt, Nt))
    assert jnp.allclose(Rt, Rt_ref, rtol=1e-4, atol=1e-6), "Rt mismatch (chunked)"
    assert jnp.allclose(Nt, Nt_ref, rtol=1e-4, atol=1e-6), "Nt mismatch (chunked)"

    print("KERNEL_OK")
</pallas_src>

<mosaic_0001>
module attributes {stable_mosaic.version = 11 : i64} {
  func.func @_crs_kernel(%arg0: i32, %arg1: i32, %arg2: memref<32x8xf32, #tpu.memory_space<vmem>>, %arg3: memref<32x128xf32, #tpu.memory_space<vmem>>, %arg4: memref<32x128xf32, #tpu.memory_space<vmem>>, %arg5: memref<32x128xf32, #tpu.memory_space<vmem>>, %arg6: memref<32x128xf32, #tpu.memory_space<vmem>>, %arg7: memref<32x128xf32, #tpu.memory_space<vmem>>, %arg8: memref<32x1xf32, #tpu.memory_space<vmem>>, %arg9: memref<32x1xf32, #tpu.memory_space<vmem>>, %arg10: memref<32x1xf32, #tpu.memory_space<vmem>>) attributes {dimension_semantics = [#tpu.dimension_semantics<parallel>, #tpu.dimension_semantics<arbitrary>], iteration_bounds = array<i64: 1, 1>, scalar_prefetch = 0 : i64, scratch_operands = 3 : i64, tpu.core_type = #tpu.core_type<tc>, window_params = [{transform_indices = @transform_0, window_bounds = array<i64: 32, 8>}, {transform_indices = @transform_1, window_bounds = array<i64: 32, 128>}, {transform_indices = @transform_2, window_bounds = array<i64: 32, 128>}, {transform_indices = @transform_3, window_bounds = array<i64: 32, 128>}, {transform_indices = @transform_4, window_bounds = array<i64: 32, 128>}, {transform_indices = @transform_5, window_bounds = array<i64: 32, 128>}]} {
    %c0 = arith.constant 0 : index
    %c0_0 = arith.constant 0 : index
    %0 = vector.load %arg2[%c0, %c0_0] : memref<32x8xf32, #tpu.memory_space<vmem>>, vector<32x1xf32>
    %c0_1 = arith.constant 0 : index
    %c1 = arith.constant 1 : index
    %1 = vector.load %arg2[%c0_1, %c1] : memref<32x8xf32, #tpu.memory_space<vmem>>, vector<32x1xf32>
    %c0_2 = arith.constant 0 : index
    %c2 = arith.constant 2 : index
    %2 = vector.load %arg2[%c0_2, %c2] : memref<32x8xf32, #tpu.memory_space<vmem>>, vector<32x1xf32>
    %c0_3 = arith.constant 0 : index
    %c3 = arith.constant 3 : index
    %3 = vector.load %arg2[%c0_3, %c3] : memref<32x8xf32, #tpu.memory_space<vmem>>, vector<32x1xf32>
    %c0_i32 = arith.constant 0 : i32
    %4 = arith.cmpi eq, %arg1, %c0_i32 : i32
    %5 = arith.extui %4 : i1 to i32
    %c0_i32_4 = arith.constant 0 : i32
    %6 = arith.cmpi ne, %5, %c0_i32_4 : i32
    scf.if %6 {
      %c0_79 = arith.constant 0 : index
      %c4 = arith.constant 4 : index
      %181 = vector.load %arg2[%c0_79, %c4] : memref<32x8xf32, #tpu.memory_space<vmem>>, vector<32x1xf32>
      %182 = tpu.reciprocal %181 {approx = true} : vector<32x1xf32> -> vector<32x1xf32>
      %183 = arith.mulf %181, %182 : vector<32x1xf32>
      %cst_80 = arith.constant 2.000000e+00 : f32
      %184 = vector.broadcast %cst_80 : f32 to vector<32x1xf32>
      %185 = arith.subf %184, %183 : vector<32x1xf32>
      %186 = arith.mulf %182, %185 : vector<32x1xf32>
      %c0_81 = arith.constant 0 : index
      %c0_82 = arith.constant 0 : index
      %187 = vector.load %arg8[%c0_81, %c0_82] : memref<32x1xf32, #tpu.memory_space<vmem>>, vector<32x1xf32>
      tpu.vector_store %arg8[%c0_81, %c0_82], %186 {strides = array<i32>} : memref<32x1xf32, #tpu.memory_space<vmem>>, vector<32x1xf32>,
      %188 = math.log %186 : vector<32x1xf32>
      %c0_83 = arith.constant 0 : index
      %c0_84 = arith.constant 0 : index
      %189 = vector.load %arg9[%c0_83, %c0_84] : memref<32x1xf32, #tpu.memory_space<vmem>>, vector<32x1xf32>
      tpu.vector_store %arg9[%c0_83, %c0_84], %188 {strides = array<i32>} : memref<32x1xf32, #tpu.memory_space<vmem>>, vector<32x1xf32>,
      %c0_85 = arith.constant 0 : index
      %c5 = arith.constant 5 : index
      %190 = vector.load %arg2[%c0_85, %c5] : memref<32x8xf32, #tpu.memory_space<vmem>>, vector<32x1xf32>
      %c0_86 = arith.constant 0 : index
      %c0_87 = arith.constant 0 : index
      %191 = vector.load %arg10[%c0_86, %c0_87] : memref<32x1xf32, #tpu.memory_space<vmem>>, vector<32x1xf32>
      tpu.vector_store %arg10[%c0_86, %c0_87], %190 {strides = array<i32>} : memref<32x1xf32, #tpu.memory_space<vmem>>, vector<32x1xf32>,
    } else {
    }
    %7 = tpu.iota {dimensions = array<i32: 1>} : vector<32x128xi32>
    %c1_i32 = arith.constant 1 : i32
    %8 = vector.broadcast %c1_i32 : i32 to vector<32x128xi32>
    %9 = arith.cmpi sge, %7, %8 : vector<32x128xi32>
    %c2_i32 = arith.constant 2 : i32
    %10 = vector.broadcast %c2_i32 : i32 to vector<32x128xi32>
    %11 = arith.cmpi sge, %7, %10 : vector<32x128xi32>
    %c4_i32 = arith.constant 4 : i32
    %12 = vector.broadcast %c4_i32 : i32 to vector<32x128xi32>
    %13 = arith.cmpi sge, %7, %12 : vector<32x128xi32>
    %c8_i32 = arith.constant 8 : i32
    %14 = vector.broadcast %c8_i32 : i32 to vector<32x128xi32>
    %15 = arith.cmpi sge, %7, %14 : vector<32x128xi32>
    %c16_i32 = arith.constant 16 : i32
    %16 = vector.broadcast %c16_i32 : i32 to vector<32x128xi32>
    %17 = arith.cmpi sge, %7, %16 : vector<32x128xi32>
    %c32_i32 = arith.constant 32 : i32
    %18 = vector.broadcast %c32_i32 : i32 to vector<32x128xi32>
    %19 = arith.cmpi sge, %7, %18 : vector<32x128xi32>
    %c64_i32 = arith.constant 64 : i32
    %20 = vector.broadcast %c64_i32 : i32 to vector<32x128xi32>
    %21 = arith.cmpi sge, %7, %20 : vector<32x128xi32>
    %c0_5 = arith.constant 0 : index
    %c0_6 = arith.constant 0 : index
    %22 = vector.load %arg3[%c0_5, %c0_6] : memref<32x128xf32, #tpu.memory_space<vmem>>, vector<32x128xf32>
    %c0_7 = arith.constant 0 : index
    %c0_8 = arith.constant 0 : index
    %23 = vector.load %arg4[%c0_7, %c0_8] : memref<32x128xf32, #tpu.memory_space<vmem>>, vector<32x128xf32>
    %c0_9 = arith.constant 0 : index
    %c0_10 = arith.constant 0 : index
    %24 = vector.load %arg5[%c0_9, %c0_10] : memref<32x128xf32, #tpu.memory_space<vmem>>, vector<32x128xf32>
    %cst = arith.constant 9.99999974E-5 : f32
    %25 = vector.broadcast %cst : f32 to vector<32x128xf32>
    %26 = arith.subf %25, %23 : vector<32x128xf32>
    %27 = vector.broadcast %0 : vector<32x1xf32> to vector<32x128xf32>
    %28 = arith.mulf %27, %26 : vector<32x128xf32>
    %cst_11 = arith.constant 1.000000e-03 : f32
    %29 = vector.broadcast %cst_11 : f32 to vector<32x128xf32>
    %30 = arith.subf %29, %28 : vector<32x128xf32>
    %cst_12 = arith.constant 6.000000e-01 : f32
    %31 = vector.broadcast %cst_12 : f32 to vector<32x128xf32>
    %32 = arith.mulf %31, %22 : vector<32x128xf32>
    %cst_13 = arith.constant 1.000000e+01 : f32
    %33 = vector.broadcast %cst_13 : f32 to vector<32x128xf32>
    %34 = arith.subf %33, %32 : vector<32x128xf32>
    %35 = vector.broadcast %1 : vector<32x1xf32> to vector<32x128xf32>
    %36 = arith.mulf %35, %34 : vector<32x128xf32>
    %37 = arith.mulf %30, %24 : vector<32x128xf32>
    %38 = tpu.reciprocal %36 {approx = true} : vector<32x128xf32> -> vector<32x128xf32>
    %39 = arith.mulf %36, %38 : vector<32x128xf32>
    %cst_14 = arith.constant 2.000000e+00 : f32
    %40 = vector.broadcast %cst_14 : f32 to vector<32x128xf32>
    %41 = arith.subf %40, %39 : vector<32x128xf32>
    %42 = arith.mulf %38, %41 : vector<32x128xf32>
    %43 = arith.mulf %37, %42 : vector<32x128xf32>
    %cst_15 = arith.constant 0.000000e+00 : f32
    %44 = vector.broadcast %cst_15 : f32 to vector<32x128xf32>
    %45 = arith.subf %44, %43 : vector<32x128xf32>
    %46 = math.exp %45 : vector<32x128xf32>
    %cst_16 = arith.constant 1.000010e+00 : f32
    %47 = vector.broadcast %cst_16 : f32 to vector<32x128xf32>
    %48 = arith.mulf %47, %46 : vector<32x128xf32>
    %49 = tpu.reciprocal %30 {approx = true} : vector<32x128xf32> -> vector<32x128xf32>
    %50 = arith.mulf %30, %49 : vector<32x128xf32>
    %cst_17 = arith.constant 2.000000e+00 : f32
    %51 = vector.broadcast %cst_17 : f32 to vector<32x128xf32>
    %52 = arith.subf %51, %50 : vector<32x128xf32>
    %53 = arith.mulf %49, %52 : vector<32x128xf32>
    %54 = vector.broadcast %2 : vector<32x1xf32> to vector<32x128xf32>
    %55 = arith.mulf %54, %53 : vector<32x128xf32>
    %cst_18 = arith.constant 1.000000e+00 : f32
    %56 = vector.broadcast %cst_18 : f32 to vector<32x128xf32>
    %57 = arith.subf %56, %46 : vector<32x128xf32>
    %58 = arith.mulf %55, %57 : vector<32x128xf32>
    %59 = vector.broadcast %3 : vector<32x1xf32> to vector<32x128xf32>
    %60 = arith.mulf %36, %59 : vector<32x128xf32>
    %c1_i32_19 = arith.constant 1 : i32
    %61 = tpu.dynamic_rotate %48 by %c1_i32_19 dim 1 : vector<32x128xf32>, i32 -> vector<32x128xf32>
    %cst_20 = arith.constant 1.000000e+00 : f32
    %62 = vector.broadcast %cst_20 : f32 to vector<32x128xf32>
    %63 = arith.select %9, %61, %62 : vector<32x128xi1>, vector<32x128xf32>
    %c1_i32_21 = arith.constant 1 : i32
    %64 = tpu.dynamic_rotate %58 by %c1_i32_21 dim 1 : vector<32x128xf32>, i32 -> vector<32x128xf32>
    %cst_22 = arith.constant 0.000000e+00 : f32
    %65 = vector.broadcast %cst_22 : f32 to vector<32x128xf32>
    %66 = arith.select %9, %64, %65 : vector<32x128xi1>, vector<32x128xf32>
    %67 = arith.mulf %48, %66 : vector<32x128xf32>
    %68 = arith.addf %67, %58 : vector<32x128xf32>
    %69 = arith.mulf %48, %63 : vector<32x128xf32>
    %c2_i32_23 = arith.constant 2 : i32
    %70 = tpu.dynamic_rotate %69 by %c2_i32_23 dim 1 : vector<32x128xf32>, i32 -> vector<32x128xf32>
    %cst_24 = arith.constant 1.000000e+00 : f32
    %71 = vector.broadcast %cst_24 : f32 to vector<32x128xf32>
    %72 = arith.select %11, %70, %71 : vector<32x128xi1>, vector<32x128xf32>
    %c2_i32_25 = arith.constant 2 : i32
    %73 = tpu.dynamic_rotate %68 by %c2_i32_25 dim 1 : vector<32x128xf32>, i32 -> vector<32x128xf32>
    %cst_26 = arith.constant 0.000000e+00 : f32
    %74 = vector.broadcast %cst_26 : f32 to vector<32x128xf32>
    %75 = arith.select %11, %73, %74 : vector<32x128xi1>, vector<32x128xf32>
    %76 = arith.mulf %69, %75 : vector<32x128xf32>
    %77 = arith.addf %76, %68 : vector<32x128xf32>
    %78 = arith.mulf %69, %72 : vector<32x128xf32>
    %c4_i32_27 = arith.constant 4 : i32
    %79 = tpu.dynamic_rotate %78 by %c4_i32_27 dim 1 : vector<32x128xf32>, i32 -> vector<32x128xf32>
    %cst_28 = arith.constant 1.000000e+00 : f32
    %80 = vector.broadcast %cst_28 : f32 to vector<32x128xf32>
    %81 = arith.select %13, %79, %80 : vector<32x128xi1>, vector<32x128xf32>
    %c4_i32_29 = arith.constant 4 : i32
    %82 = tpu.dynamic_rotate %77 by %c4_i32_29 dim 1 : vector<32x128xf32>, i32 -> vector<32x128xf32>
    %cst_30 = arith.constant 0.000000e+00 : f32
    %83 = vector.broadcast %cst_30 : f32 to vector<32x128xf32>
    %84 = arith.select %13, %82, %83 : vector<32x128xi1>, vector<32x128xf32>
    %85 = arith.mulf %78, %84 : vector<32x128xf32>
    %86 = arith.addf %85, %77 : vector<32x128xf32>
    %87 = arith.mulf %78, %81 : vector<32x128xf32>
    %c8_i32_31 = arith.constant 8 : i32
    %88 = tpu.dynamic_rotate %87 by %c8_i32_31 dim 1 : vector<32x128xf32>, i32 -> vector<32x128xf32>
    %cst_32 = arith.constant 1.000000e+00 : f32
    %89 = vector.broadcast %cst_32 : f32 to vector<32x128xf32>
    %90 = arith.select %15, %88, %89 : vector<32x128xi1>, vector<32x128xf32>
    %c8_i32_33 = arith.constant 8 : i32
    %91 = tpu.dynamic_rotate %86 by %c8_i32_33 dim 1 : vector<32x128xf32>, i32 -> vector<32x128xf32>
    %cst_34 = arith.constant 0.000000e+00 : f32
    %92 = vector.broadcast %cst_34 : f32 to vector<32x128xf32>
    %93 = arith.select %15, %91, %92 : vector<32x128xi1>, vector<32x128xf32>
    %94 = arith.mulf %87, %93 : vector<32x128xf32>
    %95 = arith.addf %94, %86 : vector<32x128xf32>
    %96 = arith.mulf %87, %90 : vector<32x128xf32>
    %c16_i32_35 = arith.constant 16 : i32
    %97 = tpu.dynamic_rotate %96 by %c16_i32_35 dim 1 : vector<32x128xf32>, i32 -> vector<32x128xf32>
    %cst_36 = arith.constant 1.000000e+00 : f32
    %98 = vector.broadcast %cst_36 : f32 to vector<32x128xf32>
    %99 = arith.select %17, %97, %98 : vector<32x128xi1>, vector<32x128xf32>
    %c16_i32_37 = arith.constant 16 : i32
    %100 = tpu.dynamic_rotate %95 by %c16_i32_37 dim 1 : vector<32x128xf32>, i32 -> vector<32x128xf32>
    %cst_38 = arith.constant 0.000000e+00 : f32
    %101 = vector.broadcast %cst_38 : f32 to vector<32x128xf32>
    %102 = arith.select %17, %100, %101 : vector<32x128xi1>, vector<32x128xf32>
    %103 = arith.mulf %96, %102 : vector<32x128xf32>
    %104 = arith.addf %103, %95 : vector<32x128xf32>
    %105 = arith.mulf %96, %99 : vector<32x128xf32>
    %c32_i32_39 = arith.constant 32 : i32
    %106 = tpu.dynamic_rotate %105 by %c32_i32_39 dim 1 : vector<32x128xf32>, i32 -> vector<32x128xf32>
    %cst_40 = arith.constant 1.000000e+00 : f32
    %107 = vector.broadcast %cst_40 : f32 to vector<32x128xf32>
    %108 = arith.select %19, %106, %107 : vector<32x128xi1>, vector<32x128xf32>
    %c32_i32_41 = arith.constant 32 : i32
    %109 = tpu.dynamic_rotate %104 by %c32_i32_41 dim 1 : vector<32x128xf32>, i32 -> vector<32x128xf32>
    %cst_42 = arith.constant 0.000000e+00 : f32
    %110 = vector.broadcast %cst_42 : f32 to vector<32x128xf32>
    %111 = arith.select %19, %109, %110 : vector<32x128xi1>, vector<32x128xf32>
    %112 = arith.mulf %105, %111 : vector<32x128xf32>
    %113 = arith.addf %112, %104 : vector<32x128xf32>
    %114 = arith.mulf %105, %108 : vector<32x128xf32>
    %c64_i32_43 = arith.constant 64 : i32
    %115 = tpu.dynamic_rotate %114 by %c64_i32_43 dim 1 : vector<32x128xf32>, i32 -> vector<32x128xf32>
    %cst_44 = arith.constant 1.000000e+00 : f32
    %116 = vector.broadcast %cst_44 : f32 to vector<32x128xf32>
    %117 = arith.select %21, %115, %116 : vector<32x128xi1>, vector<32x128xf32>
    %c64_i32_45 = arith.constant 64 : i32
    %118 = tpu.dynamic_rotate %113 by %c64_i32_45 dim 1 : vector<32x128xf32>, i32 -> vector<32x128xf32>
    %cst_46 = arith.constant 0.000000e+00 : f32
    %119 = vector.broadcast %cst_46 : f32 to vector<32x128xf32>
    %120 = arith.select %21, %118, %119 : vector<32x128xi1>, vector<32x128xf32>
    %121 = arith.mulf %114, %120 : vector<32x128xf32>
    %122 = arith.addf %121, %113 : vector<32x128xf32>
    %123 = arith.mulf %114, %117 : vector<32x128xf32>
    %c0_47 = arith.constant 0 : index
    %c0_48 = arith.constant 0 : index
    %124 = vector.load %arg8[%c0_47, %c0_48] : memref<32x1xf32, #tpu.memory_space<vmem>>, vector<32x1xf32>
    %c0_49 = arith.constant 0 : index
    %c0_50 = arith.constant 0 : index
    %125 = vector.load %arg9[%c0_49, %c0_50] : memref<32x1xf32, #tpu.memory_space<vmem>>, vector<32x1xf32>
    %c0_51 = arith.constant 0 : index
    %c0_52 = arith.constant 0 : index
    %126 = vector.load %arg10[%c0_51, %c0_52] : memref<32x1xf32, #tpu.memory_space<vmem>>, vector<32x1xf32>
    %127 = vector.broadcast %124 : vector<32x1xf32> to vector<32x128xf32>
    %128 = arith.mulf %123, %127 : vector<32x128xf32>
    %129 = arith.addf %128, %122 : vector<32x128xf32>
    %130 = math.log %129 : vector<32x128xf32>
    %c1_i32_53 = arith.constant 1 : i32
    %131 = tpu.dynamic_rotate %130 by %c1_i32_53 dim 1 : vector<32x128xf32>, i32 -> vector<32x128xf32>
    %132 = vector.shape_cast %125 : vector<32x1xf32> to vector<32x1xf32>
    %133 = vector.broadcast %132 : vector<32x1xf32> to vector<32x128xf32>
    %134 = arith.select %9, %131, %133 : vector<32x128xi1>, vector<32x128xf32>
    %135 = arith.addf %43, %130 : vector<32x128xf32>
    %136 = arith.subf %135, %134 : vector<32x128xf32>
    %137 = arith.mulf %60, %136 : vector<32x128xf32>
    %c1_i32_54 = arith.constant 1 : i32
    %138 = tpu.dynamic_rotate %137 by %c1_i32_54 dim 1 : vector<32x128xf32>, i32 -> vector<32x128xf32>
    %cst_55 = arith.constant 0.000000e+00 : f32
    %139 = vector.broadcast %cst_55 : f32 to vector<32x128xf32>
    %140 = arith.select %9, %138, %139 : vector<32x128xi1>, vector<32x128xf32>
    %141 = arith.addf %137, %140 : vector<32x128xf32>
    %c2_i32_56 = arith.constant 2 : i32
    %142 = tpu.dynamic_rotate %141 by %c2_i32_56 dim 1 : vector<32x128xf32>, i32 -> vector<32x128xf32>
    %cst_57 = arith.constant 0.000000e+00 : f32
    %143 = vector.broadcast %cst_57 : f32 to vector<32x128xf32>
    %144 = arith.select %11, %142, %143 : vector<32x128xi1>, vector<32x128xf32>
    %145 = arith.addf %141, %144 : vector<32x128xf32>
    %c4_i32_58 = arith.constant 4 : i32
    %146 = tpu.dynamic_rotate %145 by %c4_i32_58 dim 1 : vector<32x128xf32>, i32 -> vector<32x128xf32>
    %cst_59 = arith.constant 0.000000e+00 : f32
    %147 = vector.broadcast %cst_59 : f32 to vector<32x128xf32>
    %148 = arith.select %13, %146, %147 : vector<32x128xi1>, vector<32x128xf32>
    %149 = arith.addf %145, %148 : vector<32x128xf32>
    %c8_i32_60 = arith.constant 8 : i32
    %150 = tpu.dynamic_rotate %149 by %c8_i32_60 dim 1 : vector<32x128xf32>, i32 -> vector<32x128xf32>
    %cst_61 = arith.constant 0.000000e+00 : f32
    %151 = vector.broadcast %cst_61 : f32 to vector<32x128xf32>
    %152 = arith.select %15, %150, %151 : vector<32x128xi1>, vector<32x128xf32>
    %153 = arith.addf %149, %152 : vector<32x128xf32>
    %c16_i32_62 = arith.constant 16 : i32
    %154 = tpu.dynamic_rotate %153 by %c16_i32_62 dim 1 : vector<32x128xf32>, i32 -> vector<32x128xf32>
    %cst_63 = arith.constant 0.000000e+00 : f32
    %155 = vector.broadcast %cst_63 : f32 to vector<32x128xf32>
    %156 = arith.select %17, %154, %155 : vector<32x128xi1>, vector<32x128xf32>
    %157 = arith.addf %153, %156 : vector<32x128xf32>
    %c32_i32_64 = arith.constant 32 : i32
    %158 = tpu.dynamic_rotate %157 by %c32_i32_64 dim 1 : vector<32x128xf32>, i32 -> vector<32x128xf32>
    %cst_65 = arith.constant 0.000000e+00 : f32
    %159 = vector.broadcast %cst_65 : f32 to vector<32x128xf32>
    %160 = arith.select %19, %158, %159 : vector<32x128xi1>, vector<32x128xf32>
    %161 = arith.addf %157, %160 : vector<32x128xf32>
    %c64_i32_66 = arith.constant 64 : i32
    %162 = tpu.dynamic_rotate %161 by %c64_i32_66 dim 1 : vector<32x128xf32>, i32 -> vector<32x128xf32>
    %cst_67 = arith.constant 0.000000e+00 : f32
    %163 = vector.broadcast %cst_67 : f32 to vector<32x128xf32>
    %164 = arith.select %21, %162, %163 : vector<32x128xi1>, vector<32x128xf32>
    %165 = arith.addf %161, %164 : vector<32x128xf32>
    %166 = vector.broadcast %126 : vector<32x1xf32> to vector<32x128xf32>
    %167 = arith.addf %166, %165 : vector<32x128xf32>
    %168 = tpu.reciprocal %129 {approx = true} : vector<32x128xf32> -> vector<32x128xf32>
    %169 = arith.mulf %129, %168 : vector<32x128xf32>
    %cst_68 = arith.constant 2.000000e+00 : f32
    %170 = vector.broadcast %cst_68 : f32 to vector<32x128xf32>
    %171 = arith.subf %170, %169 : vector<32x128xf32>
    %172 = arith.mulf %168, %171 : vector<32x128xf32>
    %c0_69 = arith.constant 0 : index
    %c0_70 = arith.constant 0 : index
    %173 = vector.load %arg6[%c0_69, %c0_70] : memref<32x128xf32, #tpu.memory_space<vmem>>, vector<32x128xf32>
    tpu.vector_store %arg6[%c0_69, %c0_70], %172 {strides = array<i32>} : memref<32x128xf32, #tpu.memory_space<vmem>>, vector<32x128xf32>,
    %c0_71 = arith.constant 0 : index
    %c0_72 = arith.constant 0 : index
    %174 = vector.load %arg7[%c0_71, %c0_72] : memref<32x128xf32, #tpu.memory_space<vmem>>, vector<32x128xf32>
    tpu.vector_store %arg7[%c0_71, %c0_72], %167 {strides = array<i32>} : memref<32x128xf32, #tpu.memory_space<vmem>>, vector<32x128xf32>,
    %175 = vector.extract_strided_slice %129 {offsets = [0, 127], sizes = [32, 1], strides = [1, 1]} : vector<32x128xf32> to vector<32x1xf32>
    %c0_73 = arith.constant 0 : index
    %c0_74 = arith.constant 0 : index
    %176 = vector.load %arg8[%c0_73, %c0_74] : memref<32x1xf32, #tpu.memory_space<vmem>>, vector<32x1xf32>
    tpu.vector_store %arg8[%c0_73, %c0_74], %175 {strides = array<i32>} : memref<32x1xf32, #tpu.memory_space<vmem>>, vector<32x1xf32>,
    %177 = vector.extract_strided_slice %130 {offsets = [0, 127], sizes = [32, 1], strides = [1, 1]} : vector<32x128xf32> to vector<32x1xf32>
    %c0_75 = arith.constant 0 : index
    %c0_76 = arith.constant 0 : index
    %178 = vector.load %arg9[%c0_75, %c0_76] : memref<32x1xf32, #tpu.memory_space<vmem>>, vector<32x1xf32>
    tpu.vector_store %arg9[%c0_75, %c0_76], %177 {strides = array<i32>} : memref<32x1xf32, #tpu.memory_space<vmem>>, vector<32x1xf32>,
    %179 = vector.extract_strided_slice %167 {offsets = [0, 127], sizes = [32, 1], strides = [1, 1]} : vector<32x128xf32> to vector<32x1xf32>
    %c0_77 = arith.constant 0 : index
    %c0_78 = arith.constant 0 : index
    %180 = vector.load %arg10[%c0_77, %c0_78] : memref<32x1xf32, #tpu.memory_space<vmem>>, vector<32x1xf32>
    tpu.vector_store %arg10[%c0_77, %c0_78], %179 {strides = array<i32>} : memref<32x1xf32, #tpu.memory_space<vmem>>, vector<32x1xf32>,
    return
  }
  func.func @transform_0(%arg0: i32, %arg1: i32) -> (i32, i32) {
    %c0_i32 = arith.constant 0 : i32
    %c0_i32_0 = arith.constant 0 : i32
    return %arg0, %c0_i32 : i32, i32
  }
  func.func @transform_1(%arg0: i32, %arg1: i32) -> (i32, i32) {
    %c0_i32 = arith.constant 0 : i32
    return %arg0, %arg1 : i32, i32
  }
  func.func @transform_2(%arg0: i32, %arg1: i32) -> (i32, i32) {
    %c0_i32 = arith.constant 0 : i32
    return %arg0, %arg1 : i32, i32
  }
  func.func @transform_3(%arg0: i32, %arg1: i32) -> (i32, i32) {
    %c0_i32 = arith.constant 0 : i32
    return %arg0, %arg1 : i32, i32
  }
  func.func @transform_4(%arg0: i32, %arg1: i32) -> (i32, i32) {
    %c0_i32 = arith.constant 0 : i32
    return %arg0, %arg1 : i32, i32
  }
  func.func @transform_5(%arg0: i32, %arg1: i32) -> (i32, i32) {
    %c0_i32 = arith.constant 0 : i32
    return %arg0, %arg1 : i32, i32
  }
}

</mosaic_0001>

<llo_original>
// kernel: tpu_custom_call.1
$region0: #{tpu_custom_call.1}
  #allocation0 [shape = 'u32[]', space=smem, size = 0x4, offset = 0x4, fixed_abs, tag = 'smem constant byte address 0x4 - core index']
  #allocation1 [shape = 'u32[144,128]{1,0:T(1,128)}', space=vmem, size = 0x12000, scoped, tag = 'internal scratch']
  #allocation2 [shape = 'f32[32,1]{1,0:T(8,128)}', space=vmem, size = 0x4000, scoped, tag = 'scratch operand']
  #allocation3 [shape = 'f32[32,1]{1,0:T(8,128)}', space=vmem, size = 0x4000, scoped, tag = 'scratch operand']
  #allocation4 [shape = 'f32[32,1]{1,0:T(8,128)}', space=vmem, size = 0x4000, scoped, tag = 'scratch operand']
  %s0 = inlined_call_operand.vmem [shape: f32[32,8], index: 0, kind: input, shape index: {}]
  %s1 = inlined_call_operand.vmem [shape: f32[32,128], index: 1, kind: input, shape index: {}]
  %s2 = inlined_call_operand.hbm [shape: f32[32,128], index: 2, kind: input, shape index: {}]
  %s3 = inlined_call_operand.hbm [shape: f32[32,128], index: 3, kind: input, shape index: {}]
  %s4 = inlined_call_operand.hbm [shape: f32[32,128], index: 4, kind: output, shape index: {0}]
  %s5 = inlined_call_operand.hbm [shape: f32[32,128], index: 5, kind: output, shape index: {1}]
  %6 = xla_tuple %s4, %s5
  %s7 = sld [smem:[#allocation0]]
  $region46: #{tpu_custom_call.1} parent=0
    _
  %s9 = ssub.s32 1, %s7
  %s10 = scalar_select 0, %s9, %s7
  $region1: #{tpu_custom_call.1} parent=0
    #allocation5 [shape = 'u8[16384]{0}', space=vmem, size = 0x4000, scoped, tag = 'input window, operand 2, single buffered']
    #allocation6 [shape = 's32[1]{0}', space=sflag, size = 0x4, scoped, tag = 'scoped memory for tpu_custom_call.1']
    #allocation7 [shape = 's32[1]{0}', space=sflag, size = 0x4, scoped, tag = 'scoped memory for tpu_custom_call.1']
    #allocation8 [shape = 'u8[16384]{0}', space=vmem, size = 0x4000, scoped, tag = 'input window, operand 3, single buffered']
    #allocation9 [shape = 's32[1]{0}', space=sflag, size = 0x4, scoped, tag = 'scoped memory for tpu_custom_call.1']
    #allocation10 [shape = 'u8[16384]{0}', space=vmem, size = 0x4000, scoped, tag = 'output window, operand 0, single buffered']
    #allocation11 [shape = 'u8[16384]{0}', space=vmem, size = 0x4000, scoped, tag = 'output window, operand 1, single buffered']
    #allocation12 [shape = 's32[1]{0}', space=sflag, size = 0x4, scoped, tag = 'scoped memory for tpu_custom_call.1']
    %11 = vsyncpa [#allocation6], 0
    %12 = vsyncpa [#allocation9], 0
    %13 = vsyncpa [#allocation7], 0
    %14 = vsyncpa [#allocation12], 0
    // Predicated region
    $region2: #{tpu_custom_call.1} parent=1 // pred_check
      _
    $region3: #{tpu_custom_call.1} parent=1 // pred_check_branch
      %16 = sbr.rel (0) target = $region5
    $region4: #{tpu_custom_call.1} parent=1 // pred_region
      _
    $region5: #{tpu_custom_call.1} parent=1 // pred_fallthru
      _
    // Predicated region
    $region6: #{tpu_custom_call.1} parent=1 // pred_check
      _
    $region7: #{tpu_custom_call.1} parent=1 // pred_check_branch
      %18 = sbr.rel (0) target = $region9
    $region8: #{tpu_custom_call.1} parent=1 // pred_region
      _
    $region9: #{tpu_custom_call.1} parent=1 // pred_fallthru
      _
    // Predicated region
    $region10: #{tpu_custom_call.1} parent=1 // pred_check
      _
    $region11: #{tpu_custom_call.1} parent=1 // pred_check_branch
      %20 = sbr.rel (0) target = $region13
    $region12: #{tpu_custom_call.1} parent=1 // pred_region
      %s22 = ssub.s32 512, 512
      %23 = vsyncadd [#allocation6], %s22
      %s24 = sshll.u32 [#allocation5], 4
      %s25 = int_to_ptr.vmem [resolvable:$true] %s24
      %30 = dma.hbm_to_vmem [thread:$0]  %s2, 512, %s25, [#allocation6], 128, 128, 8
    $region13: #{tpu_custom_call.1} parent=1 // pred_fallthru
      _
    // Predicated region
    $region14: #{tpu_custom_call.1} parent=1 // pred_check
      _
    $region15: #{tpu_custom_call.1} parent=1 // pred_check_branch
      %32 = sbr.rel (0) target = $region17
    $region16: #{tpu_custom_call.1} parent=1 // pred_region
      %s34 = ssub.s32 512, 512
      %35 = vsyncadd [#allocation9], %s34
      %s36 = sshll.u32 [#allocation8], 4
      %s37 = int_to_ptr.vmem [resolvable:$true] %s36
      %42 = dma.hbm_to_vmem [thread:$0]  %s3, 512, %s37, [#allocation9], 128, 128, 8
    $region17: #{tpu_custom_call.1} parent=1 // pred_fallthru
      _
    // Predicated region
    $region18: #{tpu_custom_call.1} parent=1 // pred_check
      _
    $region19: #{tpu_custom_call.1} parent=1 // pred_check_branch
      %44 = sbr.rel (0) target = $region21
    $region20: #{tpu_custom_call.1} parent=1 // pred_region
      %45 = dma.done [#allocation6], 512
    $region21: #{tpu_custom_call.1} parent=1 // pred_fallthru
      _
    // Predicated region
    $region22: #{tpu_custom_call.1} parent=1 // pred_check
      _
    $region23: #{tpu_custom_call.1} parent=1 // pred_check_branch
      %47 = sbr.rel (0) target = $region25
    $region24: #{tpu_custom_call.1} parent=1 // pred_region
      %48 = dma.done [#allocation9], 512
    $region25: #{tpu_custom_call.1} parent=1 // pred_fallthru
      _
    %v49 = vld [vmem:[%s0] sm:$0xff]
    %v50 = vld [vmem:[%s0 + $0x8] sm:$0xff]
    %v51 = vld [vmem:[%s0 + $0x10] sm:$0xff]
    %v52 = vld [vmem:[%s0 + $0x18] sm:$0xff]
    %p53 = scmp.eq.s32.totalorder 0, 0
    // Predicated region
    $region26: #{tpu_custom_call.1} parent=1 // pred_check
      %p54 = pneg %p53
    $region27: #{tpu_custom_call.1} parent=1 // pred_check_branch
      %56 = sbr.rel (%p54) target = $region29
    $region28: #{tpu_custom_call.1} parent=1 // pred_region
      %v57 = vld [vmem:[%s0] sm:$0xff]
      %v58 = vld [vmem:[%s0 + $0x8] sm:$0xff]
      %v59 = vld [vmem:[%s0 + $0x10] sm:$0xff]
      %v60 = vld [vmem:[%s0 + $0x18] sm:$0xff]
      %v61 = vrcp.pop %v57
      %v62 = vrcp.pop %v58
      %v63 = vrcp.pop %v59
      %v64 = vrcp.pop %v60
      %v65 = vmul.f32 %v57, %v61
      %v66 = vmul.f32 %v58, %v62
      %v67 = vmul.f32 %v59, %v63
      %v68 = vmul.f32 %v60, %v64
      %v69 = vsub.f32 2.0, %v65
      %v70 = vsub.f32 2.0, %v66
      %v71 = vsub.f32 2.0, %v67
      %v72 = vsub.f32 2.0, %v68
      %v73 = vmul.f32 %v61, %v69
      %v74 = vmul.f32 %v62, %v70
      %v75 = vmul.f32 %v63, %v71
      %v76 = vmul.f32 %v64, %v72
      %81 = vrot.lane.b32.xlu0 %v73, 124
      %v82 = vpop.permute.xlu0 %81
      %83 = vrot.lane.b32.xlu0 %v74, 124
      %v84 = vpop.permute.xlu0 %83
      %85 = vrot.lane.b32.xlu0 %v75, 124
      %v86 = vpop.permute.xlu0 %85
      %87 = vrot.lane.b32.xlu0 %v76, 124
      %v88 = vpop.permute.xlu0 %87
      %vm93 = vcmask 7168
      %94 = vst.msk [vmem:[#allocation2] sm:$0xff] %vm93, %v82
      %95 = vst.msk [vmem:[#allocation2 + $0x8] sm:$0xff] %vm93, %v84
      %96 = vst.msk [vmem:[#allocation2 + $0x10] sm:$0xff] %vm93, %v86
      %97 = vst.msk [vmem:[#allocation2 + $0x18] sm:$0xff] %vm93, %v88
      %v98 = vlog2.pop %v73
      %v99 = vmul.f32 %v98, 0.6931472
      %v100 = vlog2.pop %v74
      %v101 = vmul.f32 %v100, 0.6931472
      %v102 = vlog2.pop %v75
      %v103 = vmul.f32 %v102, 0.6931472
      %v104 = vlog2.pop %v76
      %v105 = vmul.f32 %v104, 0.6931472
      %110 = vrot.lane.b32.xlu0 %v99, 124
      %v111 = vpop.permute.xlu0 %110
      %112 = vrot.lane.b32.xlu0 %v101, 124
      %v113 = vpop.permute.xlu0 %112
      %114 = vrot.lane.b32.xlu0 %v103, 124
      %v115 = vpop.permute.xlu0 %114
      %116 = vrot.lane.b32.xlu0 %v105, 124
      %v117 = vpop.permute.xlu0 %116
      %122 = vst.msk [vmem:[#allocation3] sm:$0xff] %vm93, %v111
      %123 = vst.msk [vmem:[#allocation3 + $0x8] sm:$0xff] %vm93, %v113
      %124 = vst.msk [vmem:[#allocation3 + $0x10] sm:$0xff] %vm93, %v115
      %125 = vst.msk [vmem:[#allocation3 + $0x18] sm:$0xff] %vm93, %v117
      %v126 = vld [vmem:[%s0] sm:$0xff]
      %v127 = vld [vmem:[%s0 + $0x8] sm:$0xff]
      %v128 = vld [vmem:[%s0 + $0x10] sm:$0xff]
      %v129 = vld [vmem:[%s0 + $0x18] sm:$0xff]
      %134 = vrot.lane.b32.xlu0 %v126, 123
      %v135 = vpop.permute.xlu0 %134
      %136 = vrot.lane.b32.xlu0 %v127, 123
      %v137 = vpop.permute.xlu0 %136
      %138 = vrot.lane.b32.xlu0 %v128, 123
      %v139 = vpop.permute.xlu0 %138
      %140 = vrot.lane.b32.xlu0 %v129, 123
      %v141 = vpop.permute.xlu0 %140
      %146 = vst.msk [vmem:[#allocation4] sm:$0xff] %vm93, %v135
      %147 = vst.msk [vmem:[#allocation4 + $0x8] sm:$0xff] %vm93, %v137
      %148 = vst.msk [vmem:[#allocation4 + $0x10] sm:$0xff] %vm93, %v139
      %149 = vst.msk [vmem:[#allocation4 + $0x18] sm:$0xff] %vm93, %v141
    $region29: #{tpu_custom_call.1} parent=1 // pred_fallthru
      _
    %v150 = vlaneseq
    %v151 = vand.u32 %v150, 127
    %vm152 = vcmp.ge.s32.totalorder %v151, 1
    %vm153 = vcmp.ge.s32.totalorder %v151, 2
    %vm154 = vcmp.ge.s32.totalorder %v151, 4
    %vm155 = vcmp.ge.s32.totalorder %v151, 8
    %vm156 = vcmp.ge.s32.totalorder %v151, 16
    %vm157 = vcmp.ge.s32.totalorder %v151, 32
    %vm158 = vcmp.ge.s32.totalorder %v151, 64
    %v159 = vld [vmem:[%s1] sm:$0xff]
    %v160 = vld [vmem:[%s1 + $0x8] sm:$0xff]
    %v161 = vld [vmem:[%s1 + $0x10] sm:$0xff]
    %v162 = vld [vmem:[%s1 + $0x18] sm:$0xff]
    %v163 = vld [vmem:[#allocation5] sm:$0xff]
    %v164 = vld [vmem:[#allocation5 + $0x8] sm:$0xff]
    %v165 = vld [vmem:[#allocation5 + $0x10] sm:$0xff]
    %v166 = vld [vmem:[#allocation5 + $0x18] sm:$0xff]
    %v167 = vld [vmem:[#allocation8] sm:$0xff]
    %v168 = vld [vmem:[#allocation8 + $0x8] sm:$0xff]
    %v169 = vld [vmem:[#allocation8 + $0x10] sm:$0xff]
    %v170 = vld [vmem:[#allocation8 + $0x18] sm:$0xff]
    %v171 = vsub.f32 0.0001, %v163
    %v172 = vsub.f32 0.0001, %v164
    %v173 = vsub.f32 0.0001, %v165
    %v174 = vsub.f32 0.0001, %v166
    %176 = vset.pattern.permute.xlu0 0
    %177 = vperm.xlu0 %176, %v49
    %v178 = vpop.permute.xlu0 %177
    %181 = vset.pattern.permute.xlu0 0
    %182 = vperm.xlu0 %181, %v50
    %v183 = vpop.permute.xlu0 %182
    %186 = vset.pattern.permute.xlu0 0
    %187 = vperm.xlu0 %186, %v51
    %v188 = vpop.permute.xlu0 %187
    %191 = vset.pattern.permute.xlu0 0
    %192 = vperm.xlu0 %191, %v52
    %v193 = vpop.permute.xlu0 %192
    %v195 = vmul.f32 %v178, %v171
    %v196 = vmul.f32 %v183, %v172
    %v197 = vmul.f32 %v188, %v173
    %v198 = vmul.f32 %v193, %v174
    %v199 = vsub.f32 0.001, %v195
    %v200 = vsub.f32 0.001, %v196
    %v201 = vsub.f32 0.001, %v197
    %v202 = vsub.f32 0.001, %v198
    %v203 = vmul.f32 %v159, 0.6
    %v204 = vmul.f32 %v160, 0.6
    %v205 = vmul.f32 %v161, 0.6
    %v206 = vmul.f32 %v162, 0.6
    %v207 = vsub.f32 10.0, %v203
    %v208 = vsub.f32 10.0, %v204
    %v209 = vsub.f32 10.0, %v205
    %v210 = vsub.f32 10.0, %v206
    %211 = vset.pattern.permute.xlu0 1
    %212 = vperm.xlu0 %211, %v49
    %v213 = vpop.permute.xlu0 %212
    %215 = vset.pattern.permute.xlu0 1
    %216 = vperm.xlu0 %215, %v50
    %v217 = vpop.permute.xlu0 %216
    %219 = vset.pattern.permute.xlu0 1
    %220 = vperm.xlu0 %219, %v51
    %v221 = vpop.permute.xlu0 %220
    %223 = vset.pattern.permute.xlu0 1
    %224 = vperm.xlu0 %223, %v52
    %v225 = vpop.permute.xlu0 %224
    %v227 = vmul.f32 %v213, %v207
    %v228 = vmul.f32 %v217, %v208
    %v229 = vmul.f32 %v221, %v209
    %v230 = vmul.f32 %v225, %v210
    %v231 = vmul.f32 %v199, %v167
    %v232 = vmul.f32 %v200, %v168
    %v233 = vmul.f32 %v201, %v169
    %v234 = vmul.f32 %v202, %v170
    %v235 = vrcp.pop %v227
    %v236 = vrcp.pop %v228
    %v237 = vrcp.pop %v229
    %v238 = vrcp.pop %v230
    %v239 = vmul.f32 %v227, %v235
    %v240 = vmul.f32 %v228, %v236
    %v241 = vmul.f32 %v229, %v237
    %v242 = vmul.f32 %v230, %v238
    %v243 = vsub.f32 2.0, %v239
    %v244 = vsub.f32 2.0, %v240
    %v245 = vsub.f32 2.0, %v241
    %v246 = vsub.f32 2.0, %v242
    %v247 = vmul.f32 %v235, %v243
    %v248 = vmul.f32 %v236, %v244
    %v249 = vmul.f32 %v237, %v245
    %v250 = vmul.f32 %v238, %v246
    %v251 = vmul.f32 %v231, %v247
    %v252 = vmul.f32 %v232, %v248
    %v253 = vmul.f32 %v233, %v249
    %v254 = vmul.f32 %v234, %v250
    %v255 = vsub.f32 0.0, %v251
    %v256 = vsub.f32 0.0, %v252
    %v257 = vsub.f32 0.0, %v253
    %v258 = vsub.f32 0.0, %v254
    %v259 = vmul.f32 %v255, 1.442695
    %v260 = vpow.pop %v259
    %v261 = vmul.f32 %v256, 1.442695
    %v262 = vpow.pop %v261
    %v263 = vmul.f32 %v257, 1.442695
    %v264 = vpow.pop %v263
    %v265 = vmul.f32 %v258, 1.442695
    %v266 = vpow.pop %v265
    %v267 = vmul.f32 %v260, 1.00001
    %v268 = vmul.f32 %v262, 1.00001
    %v269 = vmul.f32 %v264, 1.00001
    %v270 = vmul.f32 %v266, 1.00001
    %v271 = vrcp.pop %v199
    %v272 = vrcp.pop %v200
    %v273 = vrcp.pop %v201
    %v274 = vrcp.pop %v202
    %v275 = vmul.f32 %v199, %v271
    %v276 = vmul.f32 %v200, %v272
    %v277 = vmul.f32 %v201, %v273
    %v278 = vmul.f32 %v202, %v274
    %v279 = vsub.f32 2.0, %v275
    %v280 = vsub.f32 2.0, %v276
    %v281 = vsub.f32 2.0, %v277
    %v282 = vsub.f32 2.0, %v278
    %v283 = vmul.f32 %v271, %v279
    %v284 = vmul.f32 %v272, %v280
    %v285 = vmul.f32 %v273, %v281
    %v286 = vmul.f32 %v274, %v282
    %287 = vset.pattern.permute.xlu0 2
    %288 = vperm.xlu0 %287, %v49
    %v289 = vpop.permute.xlu0 %288
    %291 = vset.pattern.permute.xlu0 2
    %292 = vperm.xlu0 %291, %v50
    %v293 = vpop.permute.xlu0 %292
    %295 = vset.pattern.permute.xlu0 2
    %296 = vperm.xlu0 %295, %v51
    %v297 = vpop.permute.xlu0 %296
    %299 = vset.pattern.permute.xlu0 2
    %300 = vperm.xlu0 %299, %v52
    %v301 = vpop.permute.xlu0 %300
    %v303 = vmul.f32 %v289, %v283
    %v304 = vmul.f32 %v293, %v284
    %v305 = vmul.f32 %v297, %v285
    %v306 = vmul.f32 %v301, %v286
    %v307 = vsub.f32 1.0, %v260
    %v308 = vsub.f32 1.0, %v262
    %v309 = vsub.f32 1.0, %v264
    %v310 = vsub.f32 1.0, %v266
    %v311 = vmul.f32 %v303, %v307
    %v312 = vmul.f32 %v304, %v308
    %v313 = vmul.f32 %v305, %v309
    %v314 = vmul.f32 %v306, %v310
    %315 = vset.pattern.permute.xlu0 3
    %316 = vperm.xlu0 %315, %v49
    %v317 = vpop.permute.xlu0 %316
    %319 = vset.pattern.permute.xlu0 3
    %320 = vperm.xlu0 %319, %v50
    %v321 = vpop.permute.xlu0 %320
    %323 = vset.pattern.permute.xlu0 3
    %324 = vperm.xlu0 %323, %v51
    %v325 = vpop.permute.xlu0 %324
    %327 = vset.pattern.permute.xlu0 3
    %328 = vperm.xlu0 %327, %v52
    %v329 = vpop.permute.xlu0 %328
    %v331 = vmul.f32 %v227, %v317
    %v332 = vmul.f32 %v228, %v321
    %v333 = vmul.f32 %v229, %v325
    %v334 = vmul.f32 %v230, %v329
    %335 = vrot.lane.b32.xlu0 %v267, 1
    %v336 = vpop.permute.xlu0 %335
    %337 = vrot.lane.b32.xlu0 %v268, 1
    %v338 = vpop.permute.xlu0 %337
    %339 = vrot.lane.b32.xlu0 %v269, 1
    %v340 = vpop.permute.xlu0 %339
    %341 = vrot.lane.b32.xlu0 %v270, 1
    %v342 = vpop.permute.xlu0 %341
    %v343 = vsel %vm152, %v336, 1.0
    %v344 = vsel %vm152, %v338, 1.0
    %v345 = vsel %vm152, %v340, 1.0
    %v346 = vsel %vm152, %v342, 1.0
    %347 = vrot.lane.b32.xlu0 %v311, 1
    %v348 = vpop.permute.xlu0 %347
    %349 = vrot.lane.b32.xlu0 %v312, 1
    %v350 = vpop.permute.xlu0 %349
    %351 = vrot.lane.b32.xlu0 %v313, 1
    %v352 = vpop.permute.xlu0 %351
    %353 = vrot.lane.b32.xlu0 %v314, 1
    %v354 = vpop.permute.xlu0 %353
    %v355 = vsel %vm152, %v348, 0.0
    %v356 = vsel %vm152, %v350, 0.0
    %v357 = vsel %vm152, %v352, 0.0
    %v358 = vsel %vm152, %v354, 0.0
    %v359 = vmul.f32 %v267, %v355
    %v360 = vmul.f32 %v268, %v356
    %v361 = vmul.f32 %v269, %v357
    %v362 = vmul.f32 %v270, %v358
    %v363 = vadd.f32 %v359, %v311
    %v364 = vadd.f32 %v360, %v312
    %v365 = vadd.f32 %v361, %v313
    %v366 = vadd.f32 %v362, %v314
    %v367 = vmul.f32 %v267, %v343
    %v368 = vmul.f32 %v268, %v344
    %v369 = vmul.f32 %v269, %v345
    %v370 = vmul.f32 %v270, %v346
    %371 = vrot.lane.b32.xlu0 %v367, 2
    %v372 = vpop.permute.xlu0 %371
    %373 = vrot.lane.b32.xlu0 %v368, 2
    %v374 = vpop.permute.xlu0 %373
    %375 = vrot.lane.b32.xlu0 %v369, 2
    %v376 = vpop.permute.xlu0 %375
    %377 = vrot.lane.b32.xlu0 %v370, 2
    %v378 = vpop.permute.xlu0 %377
    %v379 = vsel %vm153, %v372, 1.0
    %v380 = vsel %vm153, %v374, 1.0
    %v381 = vsel %vm153, %v376, 1.0
    %v382 = vsel %vm153, %v378, 1.0
    %383 = vrot.lane.b32.xlu0 %v363, 2
    %v384 = vpop.permute.xlu0 %383
    %385 = vrot.lane.b32.xlu0 %v364, 2
    %v386 = vpop.permute.xlu0 %385
    %387 = vrot.lane.b32.xlu0 %v365, 2
    %v388 = vpop.permute.xlu0 %387
    %389 = vrot.lane.b32.xlu0 %v366, 2
    %v390 = vpop.permute.xlu0 %389
    %v391 = vsel %vm153, %v384, 0.0
    %v392 = vsel %vm153, %v386, 0.0
    %v393 = vsel %vm153, %v388, 0.0
    %v394 = vsel %vm153, %v390, 0.0
    %v395 = vmul.f32 %v367, %v391
    %v396 = vmul.f32 %v368, %v392
    %v397 = vmul.f32 %v369, %v393
    %v398 = vmul.f32 %v370, %v394
    %v399 = vadd.f32 %v395, %v363
    %v400 = vadd.f32 %v396, %v364
    %v401 = vadd.f32 %v397, %v365
    %v402 = vadd.f32 %v398, %v366
    %v403 = vmul.f32 %v367, %v379
    %v404 = vmul.f32 %v368, %v380
    %v405 = vmul.f32 %v369, %v381
    %v406 = vmul.f32 %v370, %v382
    %407 = vrot.lane.b32.xlu0 %v403, 4
    %v408 = vpop.permute.xlu0 %407
    %409 = vrot.lane.b32.xlu0 %v404, 4
    %v410 = vpop.permute.xlu0 %409
    %411 = vrot.lane.b32.xlu0 %v405, 4
    %v412 = vpop.permute.xlu0 %411
    %413 = vrot.lane.b32.xlu0 %v406, 4
    %v414 = vpop.permute.xlu0 %413
    %v415 = vsel %vm154, %v408, 1.0
    %v416 = vsel %vm154, %v410, 1.0
    %v417 = vsel %vm154, %v412, 1.0
    %v418 = vsel %vm154, %v414, 1.0
    %419 = vrot.lane.b32.xlu0 %v399, 4
    %v420 = vpop.permute.xlu0 %419
    %421 = vrot.lane.b32.xlu0 %v400, 4
    %v422 = vpop.permute.xlu0 %421
    %423 = vrot.lane.b32.xlu0 %v401, 4
    %v424 = vpop.permute.xlu0 %423
    %425 = vrot.lane.b32.xlu0 %v402, 4
    %v426 = vpop.permute.xlu0 %425
    %v427 = vsel %vm154, %v420, 0.0
    %v428 = vsel %vm154, %v422, 0.0
    %v429 = vsel %vm154, %v424, 0.0
    %v430 = vsel %vm154, %v426, 0.0
    %v431 = vmul.f32 %v403, %v427
    %v432 = vmul.f32 %v404, %v428
    %v433 = vmul.f32 %v405, %v429
    %v434 = vmul.f32 %v406, %v430
    %v435 = vadd.f32 %v431, %v399
    %v436 = vadd.f32 %v432, %v400
    %v437 = vadd.f32 %v433, %v401
    %v438 = vadd.f32 %v434, %v402
    %v439 = vmul.f32 %v403, %v415
    %v440 = vmul.f32 %v404, %v416
    %v441 = vmul.f32 %v405, %v417
    %v442 = vmul.f32 %v406, %v418
    %443 = vrot.lane.b32.xlu0 %v439, 8
    %v444 = vpop.permute.xlu0 %443
    %445 = vrot.lane.b32.xlu0 %v440, 8
    %v446 = vpop.permute.xlu0 %445
    %447 = vrot.lane.b32.xlu0 %v441, 8
    %v448 = vpop.permute.xlu0 %447
    %449 = vrot.lane.b32.xlu0 %v442, 8
    %v450 = vpop.permute.xlu0 %449
    %v451 = vsel %vm155, %v444, 1.0
    %v452 = vsel %vm155, %v446, 1.0
    %v453 = vsel %vm155, %v448, 1.0
    %v454 = vsel %vm155, %v450, 1.0
    %455 = vrot.lane.b32.xlu0 %v435, 8
    %v456 = vpop.permute.xlu0 %455
    %457 = vrot.lane.b32.xlu0 %v436, 8
    %v458 = vpop.permute.xlu0 %457
    %459 = vrot.lane.b32.xlu0 %v437, 8
    %v460 = vpop.permute.xlu0 %459
    %461 = vrot.lane.b32.xlu0 %v438, 8
    %v462 = vpop.permute.xlu0 %461
    %v463 = vsel %vm155, %v456, 0.0
    %v464 = vsel %vm155, %v458, 0.0
    %v465 = vsel %vm155, %v460, 0.0
    %v466 = vsel %vm155, %v462, 0.0
    %v467 = vmul.f32 %v439, %v463
    %v468 = vmul.f32 %v440, %v464
    %v469 = vmul.f32 %v441, %v465
    %v470 = vmul.f32 %v442, %v466
    %v471 = vadd.f32 %v467, %v435
    %v472 = vadd.f32 %v468, %v436
    %v473 = vadd.f32 %v469, %v437
    %v474 = vadd.f32 %v470, %v438
    %v475 = vmul.f32 %v439, %v451
    %v476 = vmul.f32 %v440, %v452
    %v477 = vmul.f32 %v441, %v453
    %v478 = vmul.f32 %v442, %v454
    %479 = vrot.lane.b32.xlu0 %v475, 16
    %v480 = vpop.permute.xlu0 %479
    %481 = vrot.lane.b32.xlu0 %v476, 16
    %v482 = vpop.permute.xlu0 %481
    %483 = vrot.lane.b32.xlu0 %v477, 16
    %v484 = vpop.permute.xlu0 %483
    %485 = vrot.lane.b32.xlu0 %v478, 16
    %v486 = vpop.permute.xlu0 %485
    %v487 = vsel %vm156, %v480, 1.0
    %v488 = vsel %vm156, %v482, 1.0
    %v489 = vsel %vm156, %v484, 1.0
    %v490 = vsel %vm156, %v486, 1.0
    %491 = vrot.lane.b32.xlu0 %v471, 16
    %v492 = vpop.permute.xlu0 %491
    %493 = vrot.lane.b32.xlu0 %v472, 16
    %v494 = vpop.permute.xlu0 %493
    %495 = vrot.lane.b32.xlu0 %v473, 16
    %v496 = vpop.permute.xlu0 %495
    %497 = vrot.lane.b32.xlu0 %v474, 16
    %v498 = vpop.permute.xlu0 %497
    %v499 = vsel %vm156, %v492, 0.0
    %v500 = vsel %vm156, %v494, 0.0
    %v501 = vsel %vm156, %v496, 0.0
    %v502 = vsel %vm156, %v498, 0.0
    %v503 = vmul.f32 %v475, %v499
    %v504 = vmul.f32 %v476, %v500
    %v505 = vmul.f32 %v477, %v501
    %v506 = vmul.f32 %v478, %v502
    %v507 = vadd.f32 %v503, %v471
    %v508 = vadd.f32 %v504, %v472
    %v509 = vadd.f32 %v505, %v473
    %v510 = vadd.f32 %v506, %v474
    %v511 = vmul.f32 %v475, %v487
    %v512 = vmul.f32 %v476, %v488
    %v513 = vmul.f32 %v477, %v489
    %v514 = vmul.f32 %v478, %v490
    %515 = vrot.lane.b32.xlu0 %v511, 32
    %v516 = vpop.permute.xlu0 %515
    %517 = vrot.lane.b32.xlu0 %v512, 32
    %v518 = vpop.permute.xlu0 %517
    %519 = vrot.lane.b32.xlu0 %v513, 32
    %v520 = vpop.permute.xlu0 %519
    %521 = vrot.lane.b32.xlu0 %v514, 32
    %v522 = vpop.permute.xlu0 %521
    %v523 = vsel %vm157, %v516, 1.0
    %v524 = vsel %vm157, %v518, 1.0
    %v525 = vsel %vm157, %v520, 1.0
    %v526 = vsel %vm157, %v522, 1.0
    %527 = vrot.lane.b32.xlu0 %v507, 32
    %v528 = vpop.permute.xlu0 %527
    %529 = vrot.lane.b32.xlu0 %v508, 32
    %v530 = vpop.permute.xlu0 %529
    %531 = vrot.lane.b32.xlu0 %v509, 32
    %v532 = vpop.permute.xlu0 %531
    %533 = vrot.lane.b32.xlu0 %v510, 32
    %v534 = vpop.permute.xlu0 %533
    %v535 = vsel %vm157, %v528, 0.0
    %v536 = vsel %vm157, %v530, 0.0
    %v537 = vsel %vm157, %v532, 0.0
    %v538 = vsel %vm157, %v534, 0.0
    %v539 = vmul.f32 %v511, %v535
    %v540 = vmul.f32 %v512, %v536
    %v541 = vmul.f32 %v513, %v537
    %v542 = vmul.f32 %v514, %v538
    %v543 = vadd.f32 %v539, %v507
    %v544 = vadd.f32 %v540, %v508
    %v545 = vadd.f32 %v541, %v509
    %v546 = vadd.f32 %v542, %v510
    %v547 = vmul.f32 %v511, %v523
    %v548 = vmul.f32 %v512, %v524
    %v549 = vmul.f32 %v513, %v525
    %v550 = vmul.f32 %v514, %v526
    %551 = vrot.lane.b32.xlu0 %v547, 64
    %v552 = vpop.permute.xlu0 %551
    %553 = vrot.lane.b32.xlu0 %v548, 64
    %v554 = vpop.permute.xlu0 %553
    %555 = vrot.lane.b32.xlu0 %v549, 64
    %v556 = vpop.permute.xlu0 %555
    %557 = vrot.lane.b32.xlu0 %v550, 64
    %v558 = vpop.permute.xlu0 %557
    %v559 = vsel %vm158, %v552, 1.0
    %v560 = vsel %vm158, %v554, 1.0
    %v561 = vsel %vm158, %v556, 1.0
    %v562 = vsel %vm158, %v558, 1.0
    %563 = vrot.lane.b32.xlu0 %v543, 64
    %v564 = vpop.permute.xlu0 %563
    %565 = vrot.lane.b32.xlu0 %v544, 64
    %v566 = vpop.permute.xlu0 %565
    %567 = vrot.lane.b32.xlu0 %v545, 64
    %v568 = vpop.permute.xlu0 %567
    %569 = vrot.lane.b32.xlu0 %v546, 64
    %v570 = vpop.permute.xlu0 %569
    %v571 = vsel %vm158, %v564, 0.0
    %v572 = vsel %vm158, %v566, 0.0
    %v573 = vsel %vm158, %v568, 0.0
    %v574 = vsel %vm158, %v570, 0.0
    %v575 = vmul.f32 %v547, %v571
    %v576 = vmul.f32 %v548, %v572
    %v577 = vmul.f32 %v549, %v573
    %v578 = vmul.f32 %v550, %v574
    %v579 = vadd.f32 %v575, %v543
    %v580 = vadd.f32 %v576, %v544
    %v581 = vadd.f32 %v577, %v545
    %v582 = vadd.f32 %v578, %v546
    %v583 = vmul.f32 %v547, %v559
    %v584 = vmul.f32 %v548, %v560
    %v585 = vmul.f32 %v549, %v561
    %v586 = vmul.f32 %v550, %v562
    %v587 = vld [vmem:[#allocation2] sm:$0xff]
    %v588 = vld [vmem:[#allocation2 + $0x8] sm:$0xff]
    %v589 = vld [vmem:[#allocation2 + $0x10] sm:$0xff]
    %v590 = vld [vmem:[#allocation2 + $0x18] sm:$0xff]
    %v591 = vld [vmem:[#allocation3] sm:$0xff]
    %v592 = vld [vmem:[#allocation3 + $0x8] sm:$0xff]
    %v593 = vld [vmem:[#allocation3 + $0x10] sm:$0xff]
    %v594 = vld [vmem:[#allocation3 + $0x18] sm:$0xff]
    %v595 = vld [vmem:[#allocation4] sm:$0xff]
    %v596 = vld [vmem:[#allocation4 + $0x8] sm:$0xff]
    %v597 = vld [vmem:[#allocation4 + $0x10] sm:$0xff]
    %v598 = vld [vmem:[#allocation4 + $0x18] sm:$0xff]
    %600 = vset.pattern.permute.xlu0 0
    %601 = vperm.xlu0 %600, %v587
    %v602 = vpop.permute.xlu0 %601
    %605 = vset.pattern.permute.xlu0 0
    %606 = vperm.xlu0 %605, %v588
    %v607 = vpop.permute.xlu0 %606
    %610 = vset.pattern.permute.xlu0 0
    %611 = vperm.xlu0 %610, %v589
    %v612 = vpop.permute.xlu0 %611
    %615 = vset.pattern.permute.xlu0 0
    %616 = vperm.xlu0 %615, %v590
    %v617 = vpop.permute.xlu0 %616
    %v619 = vmul.f32 %v583, %v602
    %v620 = vmul.f32 %v584, %v607
    %v621 = vmul.f32 %v585, %v612
    %v622 = vmul.f32 %v586, %v617
    %v623 = vadd.f32 %v619, %v579
    %v624 = vadd.f32 %v620, %v580
    %v625 = vadd.f32 %v621, %v581
    %v626 = vadd.f32 %v622, %v582
    %v627 = vlog2.pop %v623
    %v628 = vmul.f32 %v627, 0.6931472
    %v629 = vlog2.pop %v624
    %v630 = vmul.f32 %v629, 0.6931472
    %v631 = vlog2.pop %v625
    %v632 = vmul.f32 %v631, 0.6931472
    %v633 = vlog2.pop %v626
    %v634 = vmul.f32 %v633, 0.6931472
    %635 = vrot.lane.b32.xlu0 %v628, 1
    %v636 = vpop.permute.xlu0 %635
    %637 = vrot.lane.b32.xlu0 %v630, 1
    %v638 = vpop.permute.xlu0 %637
    %639 = vrot.lane.b32.xlu0 %v632, 1
    %v640 = vpop.permute.xlu0 %639
    %641 = vrot.lane.b32.xlu0 %v634, 1
    %v642 = vpop.permute.xlu0 %641
    %644 = vset.pattern.permute.xlu0 0
    %645 = vperm.xlu0 %644, %v591
    %v646 = vpop.permute.xlu0 %645
    %649 = vset.pattern.permute.xlu0 0
    %650 = vperm.xlu0 %649, %v592
    %v651 = vpop.permute.xlu0 %650
    %654 = vset.pattern.permute.xlu0 0
    %655 = vperm.xlu0 %654, %v593
    %v656 = vpop.permute.xlu0 %655
    %659 = vset.pattern.permute.xlu0 0
    %660 = vperm.xlu0 %659, %v594
    %v661 = vpop.permute.xlu0 %660
    %v663 = vsel %vm152, %v636, %v646
    %v664 = vsel %vm152, %v638, %v651
    %v665 = vsel %vm152, %v640, %v656
    %v666 = vsel %vm152, %v642, %v661
    %v667 = vadd.f32 %v251, %v628
    %v668 = vadd.f32 %v252, %v630
    %v669 = vadd.f32 %v253, %v632
    %v670 = vadd.f32 %v254, %v634
    %v671 = vsub.f32 %v667, %v663
    %v672 = vsub.f32 %v668, %v664
    %v673 = vsub.f32 %v669, %v665
    %v674 = vsub.f32 %v670, %v666
    %v675 = vmul.f32 %v331, %v671
    %v676 = vmul.f32 %v332, %v672
    %v677 = vmul.f32 %v333, %v673
    %v678 = vmul.f32 %v334, %v674
    %679 = vrot.lane.b32.xlu0 %v675, 1
    %v680 = vpop.permute.xlu0 %679
    %681 = vrot.lane.b32.xlu0 %v676, 1
    %v682 = vpop.permute.xlu0 %681
    %683 = vrot.lane.b32.xlu0 %v677, 1
    %v684 = vpop.permute.xlu0 %683
    %685 = vrot.lane.b32.xlu0 %v678, 1
    %v686 = vpop.permute.xlu0 %685
    %v687 = vsel %vm152, %v680, 0.0
    %v688 = vsel %vm152, %v682, 0.0
    %v689 = vsel %vm152, %v684, 0.0
    %v690 = vsel %vm152, %v686, 0.0
    %v691 = vadd.f32 %v675, %v687
    %v692 = vadd.f32 %v676, %v688
    %v693 = vadd.f32 %v677, %v689
    %v694 = vadd.f32 %v678, %v690
    %695 = vrot.lane.b32.xlu0 %v691, 2
    %v696 = vpop.permute.xlu0 %695
    %697 = vrot.lane.b32.xlu0 %v692, 2
    %v698 = vpop.permute.xlu0 %697
    %699 = vrot.lane.b32.xlu0 %v693, 2
    %v700 = vpop.permute.xlu0 %699
    %701 = vrot.lane.b32.xlu0 %v694, 2
    %v702 = vpop.permute.xlu0 %701
    %v703 = vsel %vm153, %v696, 0.0
    %v704 = vsel %vm153, %v698, 0.0
    %v705 = vsel %vm153, %v700, 0.0
    %v706 = vsel %vm153, %v702, 0.0
    %v707 = vadd.f32 %v691, %v703
    %v708 = vadd.f32 %v692, %v704
    %v709 = vadd.f32 %v693, %v705
    %v710 = vadd.f32 %v694, %v706
    %711 = vrot.lane.b32.xlu0 %v707, 4
    %v712 = vpop.permute.xlu0 %711
    %713 = vrot.lane.b32.xlu0 %v708, 4
    %v714 = vpop.permute.xlu0 %713
    %715 = vrot.lane.b32.xlu0 %v709, 4
    %v716 = vpop.permute.xlu0 %715
    %717 = vrot.lane.b32.xlu0 %v710, 4
    %v718 = vpop.permute.xlu0 %717
    %v719 = vsel %vm154, %v712, 0.0
    %v720 = vsel %vm154, %v714, 0.0
    %v721 = vsel %vm154, %v716, 0.0
    %v722 = vsel %vm154, %v718, 0.0
    %v723 = vadd.f32 %v707, %v719
    %v724 = vadd.f32 %v708, %v720
    %v725 = vadd.f32 %v709, %v721
    %v726 = vadd.f32 %v710, %v722
    %727 = vrot.lane.b32.xlu0 %v723, 8
    %v728 = vpop.permute.xlu0 %727
    %729 = vrot.lane.b32.xlu0 %v724, 8
    %v730 = vpop.permute.xlu0 %729
    %731 = vrot.lane.b32.xlu0 %v725, 8
    %v732 = vpop.permute.xlu0 %731
    %733 = vrot.lane.b32.xlu0 %v726, 8
    %v734 = vpop.permute.xlu0 %733
    %v735 = vsel %vm155, %v728, 0.0
    %v736 = vsel %vm155, %v730, 0.0
    %v737 = vsel %vm155, %v732, 0.0
    %v738 = vsel %vm155, %v734, 0.0
    %v739 = vadd.f32 %v723, %v735
    %v740 = vadd.f32 %v724, %v736
    %v741 = vadd.f32 %v725, %v737
    %v742 = vadd.f32 %v726, %v738
    %743 = vrot.lane.b32.xlu0 %v739, 16
    %v744 = vpop.permute.xlu0 %743
    %745 = vrot.lane.b32.xlu0 %v740, 16
    %v746 = vpop.permute.xlu0 %745
    %747 = vrot.lane.b32.xlu0 %v741, 16
    %v748 = vpop.permute.xlu0 %747
    %749 = vrot.lane.b32.xlu0 %v742, 16
    %v750 = vpop.permute.xlu0 %749
    %v751 = vsel %vm156, %v744, 0.0
    %v752 = vsel %vm156, %v746, 0.0
    %v753 = vsel %vm156, %v748, 0.0
    %v754 = vsel %vm156, %v750, 0.0
    %v755 = vadd.f32 %v739, %v751
    %v756 = vadd.f32 %v740, %v752
    %v757 = vadd.f32 %v741, %v753
    %v758 = vadd.f32 %v742, %v754
    %759 = vrot.lane.b32.xlu0 %v755, 32
    %v760 = vpop.permute.xlu0 %759
    %761 = vrot.lane.b32.xlu0 %v756, 32
    %v762 = vpop.permute.xlu0 %761
    %763 = vrot.lane.b32.xlu0 %v757, 32
    %v764 = vpop.permute.xlu0 %763
    %765 = vrot.lane.b32.xlu0 %v758, 32
    %v766 = vpop.permute.xlu0 %765
    %v767 = vsel %vm157, %v760, 0.0
    %v768 = vsel %vm157, %v762, 0.0
    %v769 = vsel %vm157, %v764, 0.0
    %v770 = vsel %vm157, %v766, 0.0
    %v771 = vadd.f32 %v755, %v767
    %v772 = vadd.f32 %v756, %v768
    %v773 = vadd.f32 %v757, %v769
    %v774 = vadd.f32 %v758, %v770
    %775 = vrot.lane.b32.xlu0 %v771, 64
    %v776 = vpop.permute.xlu0 %775
    %777 = vrot.lane.b32.xlu0 %v772, 64
    %v778 = vpop.permute.xlu0 %777
    %779 = vrot.lane.b32.xlu0 %v773, 64
    %v780 = vpop.permute.xlu0 %779
    %781 = vrot.lane.b32.xlu0 %v774, 64
    %v782 = vpop.permute.xlu0 %781
    %v783 = vsel %vm158, %v776, 0.0
    %v784 = vsel %vm158, %v778, 0.0
    %v785 = vsel %vm158, %v780, 0.0
    %v786 = vsel %vm158, %v782, 0.0
    %v787 = vadd.f32 %v771, %v783
    %v788 = vadd.f32 %v772, %v784
    %v789 = vadd.f32 %v773, %v785
    %v790 = vadd.f32 %v774, %v786
    %792 = vset.pattern.permute.xlu0 0
    %793 = vperm.xlu0 %792, %v595
    %v794 = vpop.permute.xlu0 %793
    %797 = vset.pattern.permute.xlu0 0
    %798 = vperm.xlu0 %797, %v596
    %v799 = vpop.permute.xlu0 %798
    %802 = vset.pattern.permute.xlu0 0
    %803 = vperm.xlu0 %802, %v597
    %v804 = vpop.permute.xlu0 %803
    %807 = vset.pattern.permute.xlu0 0
    %808 = vperm.xlu0 %807, %v598
    %v809 = vpop.permute.xlu0 %808
    %v811 = vadd.f32 %v794, %v787
    %v812 = vadd.f32 %v799, %v788
    %v813 = vadd.f32 %v804, %v789
    %v814 = vadd.f32 %v809, %v790
    %v815 = vrcp.pop %v623
    %v816 = vrcp.pop %v624
    %v817 = vrcp.pop %v625
    %v818 = vrcp.pop %v626
    %v819 = vmul.f32 %v623, %v815
    %v820 = vmul.f32 %v624, %v816
    %v821 = vmul.f32 %v625, %v817
    %v822 = vmul.f32 %v626, %v818
    %v823 = vsub.f32 2.0, %v819
    %v824 = vsub.f32 2.0, %v820
    %v825 = vsub.f32 2.0, %v821
    %v826 = vsub.f32 2.0, %v822
    %v827 = vmul.f32 %v815, %v823
    %v828 = vmul.f32 %v816, %v824
    %v829 = vmul.f32 %v817, %v825
    %v830 = vmul.f32 %v818, %v826
    %831 = vst [vmem:[#allocation10] sm:$0xff] %v827
    %832 = vst [vmem:[#allocation10 + $0x8] sm:$0xff] %v828
    %833 = vst [vmem:[#allocation10 + $0x10] sm:$0xff] %v829
    %834 = vst [vmem:[#allocation10 + $0x18] sm:$0xff] %v830
    %835 = vst [vmem:[#allocation11] sm:$0xff] %v811
    %836 = vst [vmem:[#allocation11 + $0x8] sm:$0xff] %v812
    %837 = vst [vmem:[#allocation11 + $0x10] sm:$0xff] %v813
    %838 = vst [vmem:[#allocation11 + $0x18] sm:$0xff] %v814
    %843 = vrot.lane.b32.xlu0 %v623, 1
    %v844 = vpop.permute.xlu0 %843
    %845 = vrot.lane.b32.xlu0 %v624, 1
    %v846 = vpop.permute.xlu0 %845
    %847 = vrot.lane.b32.xlu0 %v625, 1
    %v848 = vpop.permute.xlu0 %847
    %849 = vrot.lane.b32.xlu0 %v626, 1
    %v850 = vpop.permute.xlu0 %849
    %vm855 = vcmask 7168
    %856 = vst.msk [vmem:[#allocation2] sm:$0xff] %vm855, %v844
    %857 = vst.msk [vmem:[#allocation2 + $0x8] sm:$0xff] %vm855, %v846
    %858 = vst.msk [vmem:[#allocation2 + $0x10] sm:$0xff] %vm855, %v848
    %859 = vst.msk [vmem:[#allocation2 + $0x18] sm:$0xff] %vm855, %v850
    %864 = vrot.lane.b32.xlu0 %v628, 1
    %v865 = vpop.permute.xlu0 %864
    %866 = vrot.lane.b32.xlu0 %v630, 1
    %v867 = vpop.permute.xlu0 %866
    %868 = vrot.lane.b32.xlu0 %v632, 1
    %v869 = vpop.permute.xlu0 %868
    %870 = vrot.lane.b32.xlu0 %v634, 1
    %v871 = vpop.permute.xlu0 %870
    %876 = vst.msk [vmem:[#allocation3] sm:$0xff] %vm855, %v865
    %877 = vst.msk [vmem:[#allocation3 + $0x8] sm:$0xff] %vm855, %v867
    %878 = vst.msk [vmem:[#allocation3 + $0x10] sm:$0xff] %vm855, %v869
    %879 = vst.msk [vmem:[#allocation3 + $0x18] sm:$0xff] %vm855, %v871
    %884 = vrot.lane.b32.xlu0 %v811, 1
    %v885 = vpop.permute.xlu0 %884
    %886 = vrot.lane.b32.xlu0 %v812, 1
    %v887 = vpop.permute.xlu0 %886
    %888 = vrot.lane.b32.xlu0 %v813, 1
    %v889 = vpop.permute.xlu0 %888
    %890 = vrot.lane.b32.xlu0 %v814, 1
    %v891 = vpop.permute.xlu0 %890
    %896 = vst.msk [vmem:[#allocation4] sm:$0xff] %vm855, %v885
    %897 = vst.msk [vmem:[#allocation4 + $0x8] sm:$0xff] %vm855, %v887
    %898 = vst.msk [vmem:[#allocation4 + $0x10] sm:$0xff] %vm855, %v889
    %899 = vst.msk [vmem:[#allocation4 + $0x18] sm:$0xff] %vm855, %v891
    // Predicated region
    $region30: #{tpu_custom_call.1} parent=1 // pred_check
      _
    $region31: #{tpu_custom_call.1} parent=1 // pred_check_branch
      %901 = sbr.rel (0) target = $region33
    $region32: #{tpu_custom_call.1} parent=1 // pred_region
      %s903 = ssub.s32 512, 512
      %904 = vsyncadd [#allocation7], %s903
      %s905 = sshll.u32 [#allocation10], 4
      %s906 = int_to_ptr.vmem [resolvable:$true] %s905
      %911 = dma.vmem_to_hbm [thread:$0]  %s906, 512, %s4, [#allocation7], 128, 128, 8
    $region33: #{tpu_custom_call.1} parent=1 // pred_fallthru
      _
    // Predicated region
    $region34: #{tpu_custom_call.1} parent=1 // pred_check
      _
    $region35: #{tpu_custom_call.1} parent=1 // pred_check_branch
      %913 = sbr.rel (0) target = $region37
    $region36: #{tpu_custom_call.1} parent=1 // pred_region
      %s915 = ssub.s32 512, 512
      %916 = vsyncadd [#allocation12], %s915
      %s917 = sshll.u32 [#allocation11], 4
      %s918 = int_to_ptr.vmem [resolvable:$true] %s917
      %923 = dma.vmem_to_hbm [thread:$0]  %s918, 512, %s5, [#allocation12], 128, 128, 8
    $region37: #{tpu_custom_call.1} parent=1 // pred_fallthru
      _
    // Predicated region
    $region38: #{tpu_custom_call.1} parent=1 // pred_check
      _
    $region39: #{tpu_custom_call.1} parent=1 // pred_check_branch
      %925 = sbr.rel (0) target = $region41
    $region40: #{tpu_custom_call.1} parent=1 // pred_region
      %926 = dma.done [#allocation7], 512
    $region41: #{tpu_custom_call.1} parent=1 // pred_fallthru
      _
    // Predicated region
    $region42: #{tpu_custom_call.1} parent=1 // pred_check
      _
    $region43: #{tpu_custom_call.1} parent=1 // pred_check_branch
      %928 = sbr.rel (0) target = $region45
    $region44: #{tpu_custom_call.1} parent=1 // pred_region
      %929 = dma.done [#allocation12], 512
    $region45: #{tpu_custom_call.1} parent=1 // pred_fallthru
      _
    %930 = vsyncpa [#allocation6], 1
    %931 = vsyncpa [#allocation9], 1
    %932 = vsyncpa [#allocation7], 1
    %933 = vsyncpa [#allocation12], 1

</llo_original>
